<compile_context>
chip_gen: v5e
topology: v5e:2x2
jax: 0.10.0
libtpu: 0.0.40
codegen_flags: <defaults>
</compile_context>

<pallas_src>
import jax
import jax.numpy as jnp
from jax.experimental import pallas as pl
from jax.experimental.pallas import tpu as pltpu


def _round_up(x, m):
    return (x + m - 1) // m * m


def _montage_kernel(img_ref, cm_ref, gt_ref, out_ref):
    """One montage-row / H-tile step.

    img_ref: (3, TILE_H, W)   -- input1 (row 0) or input2 (row 1), via BlockSpec
    cm_ref, gt_ref: (TILE_H, W)
    out_ref: (3, TILE_H, 3*W) -- [ img | changemap | GT ] for this tile
    """
    th, w = cm_ref.shape

    # Column 0: RGB panel -- straight full-tile copy.
    out_ref[:, :, 0:w] = img_ref[...].astype(out_ref.dtype)

    # Columns 1/2: grayscale panels.  cmap='gray' display just replicates the
    # single channel; broadcast along the leading channel dim (not lane or
    # sublane, so no extra vreg traffic) and store each panel in one shot.
    cm = jnp.broadcast_to(cm_ref[...].astype(out_ref.dtype)[None], (3, th, w))
    gt = jnp.broadcast_to(gt_ref[...].astype(out_ref.dtype)[None], (3, th, w))
    out_ref[:, :, w:2 * w] = cm
    out_ref[:, :, 2 * w:3 * w] = gt


def _pick_tile_h(hp, wp, in_itemsize, out_itemsize,
                 budget_bytes=28 * 1024 * 1024):
    """Largest multiple-of-16 divisor of hp whose double-buffered footprint
    (stacked-input block + cm + gt + (3,TILE_H,3W) output block) fits budget."""
    def footprint(t):
        per_step = (3 * t * wp + 2 * t * wp) * in_itemsize \
                   + 3 * t * 3 * wp * out_itemsize
        return 2 * per_step  # double-buffered

    best = 16
    t = 16
    while t <= hp:
        if hp % t == 0 and footprint(t) <= budget_bytes:
            best = t
        t += 16
    return best


def _pad_hw(x, hp, wp):
    h, w = x.shape[-2], x.shape[-1]
    if (h, w) == (hp, wp):
        return x
    pad = [(0, 0)] * (x.ndim - 2) + [(0, hp - h), (0, wp - w)]
    return jnp.pad(x, pad)


def printpic_pallas(input1, input2, changemap, ture, out_dtype=jnp.bfloat16):
    """Pallas version of printpic.forward.

    Args:
      input1, input2: (3, H, W) float32 RGB images (CHW).
      changemap, ture: (H, W) float32 grayscale maps.
      out_dtype: montage dtype (bfloat16 by default to halve output HBM traffic).

    Returns:
      (3, 2*H, 3*W) montage: row 0 = [input1|changemap|GT], row 1 = [input2|changemap|GT].
    """
    C, H, W = input1.shape
    assert C == 3 and input2.shape == (3, H, W)
    assert changemap.shape == (H, W) and ture.shape == (H, W)

    # Lane/sublane alignment: W -> multiple of 128 (lane-dense, unmasked panel
    # stores), H -> multiple of 16 (sublane tiling, bf16-safe).  Typical image
    # sizes (e.g. 1024, 2048) need no padding at all.
    Hp = _round_up(H, 16)
    Wp = _round_up(W, 128)
    padded = (Hp, Wp) != (H, W)

    imgs = jnp.stack([_pad_hw(input1, Hp, Wp), _pad_hw(input2, Hp, Wp)], axis=0)
    cm = _pad_hw(changemap, Hp, Wp)
    gt = _pad_hw(ture, Hp, Wp)

    in_itemsize = jnp.dtype(imgs.dtype).itemsize
    out_itemsize = jnp.dtype(out_dtype).itemsize
    tile_h = _pick_tile_h(Hp, Wp, in_itemsize, out_itemsize)
    nh = Hp // tile_h

    # Pure data movement: advisory byte count for the XLA scheduler.
    bytes_accessed = (imgs.size + 2 * cm.size + 2 * gt.size) * in_itemsize \
                     + 3 * (2 * Hp) * (3 * Wp) * out_itemsize

    montage_p = pl.pallas_call(
        _montage_kernel,
        out_shape=jax.ShapeDtypeStruct((3, 2 * Hp, 3 * Wp), out_dtype),
        grid_spec=pltpu.PrefetchScalarGridSpec(
            num_scalar_prefetch=0,
            grid=(2, nh),  # (montage row, H tile) -- both embarrassingly parallel
            in_specs=[
                # stacked [input1, input2]: montage row selects the image.
                pl.BlockSpec((pl.Squeezed(), 3, tile_h, Wp),
                             lambda r, i: (r, 0, i, 0)),
                pl.BlockSpec((tile_h, Wp), lambda r, i: (i, 0)),   # changemap
                pl.BlockSpec((tile_h, Wp), lambda r, i: (i, 0)),   # ture (GT)
            ],
            out_specs=pl.BlockSpec((3, tile_h, 3 * Wp),
                                   lambda r, i: (0, r * nh + i, 0)),
        ),
        compiler_params=pltpu.CompilerParams(
            dimension_semantics=("parallel", "parallel"),
        ),
        cost_estimate=pl.CostEstimate(flops=0, transcendentals=0,
                                      bytes_accessed=int(bytes_accessed)),
    )(imgs, cm, gt)

    if not padded:
        return montage_p

    # Padding was only needed for lane/sublane alignment: crop each panel back
    # out and reassemble the exact-size montage (host-side, small-shape path).
    def panel(r, c):
        return montage_p[:, r * Hp:r * Hp + H, c * Wp:c * Wp + W]

    top = jnp.concatenate([panel(0, 0), panel(0, 1), panel(0, 2)], axis=2)
    bot = jnp.concatenate([panel(1, 0), panel(1, 1), panel(1, 2)], axis=2)
    return jnp.concatenate([top, bot], axis=1)


def montage_to_hwc(montage_chw):
    """Optional channels-last view (2*H, 3*W, 3) for display consumers only."""
    return jnp.transpose(montage_chw, (1, 2, 0))


def printpic_reference(input1, input2, changemap, ture):
    """Plain-JAX reference (float32 CHW montage) for correctness checking."""
    H, W = changemap.shape
    cm3 = jnp.broadcast_to(changemap[None], (3, H, W))
    gt3 = jnp.broadcast_to(ture[None], (3, H, W))
    top = jnp.concatenate([input1, cm3, gt3], axis=2)   # (3, H, 3W)
    bot = jnp.concatenate([input2, cm3, gt3], axis=2)   # (3, H, 3W)
    return jnp.concatenate([top, bot], axis=1)          # (3, 2H, 3W)


if __name__ == "__main__":
    key = jax.random.PRNGKey(0)
    k1, k2, k3, k4 = jax.random.split(key, 4)

    H, W = 16, 16
    input1 = jax.random.uniform(k1, (3, H, W), dtype=jnp.float32)
    input2 = jax.random.uniform(k2, (3, H, W), dtype=jnp.float32)
    changemap = (jax.random.uniform(k3, (H, W)) > 0.5).astype(jnp.float32)
    ture = (jax.random.uniform(k4, (H, W)) > 0.5).astype(jnp.float32)

    ref = printpic_reference(input1, input2, changemap, ture)

    # Default (bfloat16 montage) path.
    out = printpic_pallas(input1, input2, changemap, ture)
    out = jax.block_until_ready(out)
    assert out.shape == (3, 2 * H, 3 * W), out.shape
    ref_bf = ref.astype(out.dtype).astype(jnp.float32)
    assert jnp.allclose(out.astype(jnp.float32), ref_bf, rtol=1e-2, atol=1e-2), \
        "mismatch vs reference (bf16 montage)"

    # Full-precision path.
    out_f32 = jax.block_until_ready(
        printpic_pallas(input1, input2, changemap, ture, out_dtype=jnp.float32))
    assert out_f32.shape == (3, 2 * H, 3 * W)
    assert jnp.allclose(out_f32, ref), "mismatch vs reference (f32 montage)"

    # Optional display-layout conversion sanity check.
    hwc = montage_to_hwc(out_f32)
    assert hwc.shape == (2 * H, 3 * W, 3)
    assert jnp.allclose(hwc, jnp.transpose(ref, (1, 2, 0)))

    print("KERNEL_OK")
</pallas_src>

<mosaic_0001>
module attributes {stable_mosaic.version = 11 : i64} {
  func.func @_montage_kernel(%arg0: i32, %arg1: i32, %arg2: memref<1x3x16x128xf32, #tpu.memory_space<vmem>>, %arg3: memref<16x128xf32, #tpu.memory_space<vmem>>, %arg4: memref<16x128xf32, #tpu.memory_space<vmem>>, %arg5: memref<3x16x384xbf16, #tpu.memory_space<vmem>>) attributes {dimension_semantics = [#tpu.dimension_semantics<parallel>, #tpu.dimension_semantics<parallel>], iteration_bounds = array<i64: 2, 1>, scalar_prefetch = 0 : i64, scratch_operands = 0 : i64, tpu.core_type = #tpu.core_type<tc>, window_params = [{transform_indices = @transform_0, window_bounds = array<i64: 1, 3, 16, 128>}, {transform_indices = @transform_1, window_bounds = array<i64: 16, 128>}, {transform_indices = @transform_2, window_bounds = array<i64: 16, 128>}, {transform_indices = @transform_3, window_bounds = array<i64: 3, 16, 384>}]} {
    %c0 = arith.constant 0 : index
    %c0_0 = arith.constant 0 : index
    %c0_1 = arith.constant 0 : index
    %c0_2 = arith.constant 0 : index
    %0 = vector.load %arg2[%c0, %c0_0, %c0_1, %c0_2] : memref<1x3x16x128xf32, #tpu.memory_space<vmem>>, vector<1x3x16x128xf32>
    %1 = vector.shape_cast %0 : vector<1x3x16x128xf32> to vector<3x16x128xf32>
    %2 = arith.truncf %1 : vector<3x16x128xf32> to vector<3x16x128xbf16>
    %c0_3 = arith.constant 0 : index
    %c0_4 = arith.constant 0 : index
    %c0_5 = arith.constant 0 : index
    %3 = vector.load %arg5[%c0_3, %c0_4, %c0_5] : memref<3x16x384xbf16, #tpu.memory_space<vmem>>, vector<3x16x128xbf16>
    tpu.vector_store %arg5[%c0_3, %c0_4, %c0_5], %2 {strides = array<i32>} : memref<3x16x384xbf16, #tpu.memory_space<vmem>>, vector<3x16x128xbf16>,
    %c0_6 = arith.constant 0 : index
    %c0_7 = arith.constant 0 : index
    %4 = vector.load %arg3[%c0_6, %c0_7] : memref<16x128xf32, #tpu.memory_space<vmem>>, vector<16x128xf32>
    %5 = arith.truncf %4 : vector<16x128xf32> to vector<16x128xbf16>
    %6 = vector.shape_cast %5 : vector<16x128xbf16> to vector<1x16x128xbf16>
    %7 = vector.shape_cast %6 : vector<1x16x128xbf16> to vector<1x16x128xbf16>
    %8 = vector.broadcast %7 : vector<1x16x128xbf16> to vector<3x16x128xbf16>
    %c0_8 = arith.constant 0 : index
    %c0_9 = arith.constant 0 : index
    %9 = vector.load %arg4[%c0_8, %c0_9] : memref<16x128xf32, #tpu.memory_space<vmem>>, vector<16x128xf32>
    %10 = arith.truncf %9 : vector<16x128xf32> to vector<16x128xbf16>
    %11 = vector.shape_cast %10 : vector<16x128xbf16> to vector<1x16x128xbf16>
    %12 = vector.shape_cast %11 : vector<1x16x128xbf16> to vector<1x16x128xbf16>
    %13 = vector.broadcast %12 : vector<1x16x128xbf16> to vector<3x16x128xbf16>
    %c0_10 = arith.constant 0 : index
    %c0_11 = arith.constant 0 : index
    %c128 = arith.constant 128 : index
    %14 = vector.load %arg5[%c0_10, %c0_11, %c128] : memref<3x16x384xbf16, #tpu.memory_space<vmem>>, vector<3x16x128xbf16>
    tpu.vector_store %arg5[%c0_10, %c0_11, %c128], %8 {strides = array<i32>} : memref<3x16x384xbf16, #tpu.memory_space<vmem>>, vector<3x16x128xbf16>,
    %c0_12 = arith.constant 0 : index
    %c0_13 = arith.constant 0 : index
    %c256 = arith.constant 256 : index
    %15 = vector.load %arg5[%c0_12, %c0_13, %c256] : memref<3x16x384xbf16, #tpu.memory_space<vmem>>, vector<3x16x128xbf16>
    tpu.vector_store %arg5[%c0_12, %c0_13, %c256], %13 {strides = array<i32>} : memref<3x16x384xbf16, #tpu.memory_space<vmem>>, vector<3x16x128xbf16>,
    return
  }
  func.func @transform_0(%arg0: i32, %arg1: i32) -> (i32, i32, i32, i32) {
    %c0_i32 = arith.constant 0 : i32
    %c0_i32_0 = arith.constant 0 : i32
    %c0_i32_1 = arith.constant 0 : i32
    return %arg0, %c0_i32, %arg1, %c0_i32_0 : i32, i32, i32, i32
  }
  func.func @transform_1(%arg0: i32, %arg1: i32) -> (i32, i32) {
    %c0_i32 = arith.constant 0 : i32
    %c0_i32_0 = arith.constant 0 : i32
    return %arg1, %c0_i32 : i32, i32
  }
  func.func @transform_2(%arg0: i32, %arg1: i32) -> (i32, i32) {
    %c0_i32 = arith.constant 0 : i32
    %c0_i32_0 = arith.constant 0 : i32
    return %arg1, %c0_i32 : i32, i32
  }
  func.func @transform_3(%arg0: i32, %arg1: i32) -> (i32, i32, i32) {
    %c1_i32 = arith.constant 1 : i32
    %0 = arith.muli %arg0, %c1_i32 : i32
    %1 = arith.addi %0, %arg1 : i32
    %c0_i32 = arith.constant 0 : i32
    %c0_i32_0 = arith.constant 0 : i32
    %c0_i32_1 = arith.constant 0 : i32
    return %c0_i32, %1, %c0_i32_0 : i32, i32, i32
  }
}

</mosaic_0001>

<llo_original>
// kernel: tpu_custom_call.1
$region0: #{tpu_custom_call.1}
  #allocation0 [shape = 'u32[]', space=smem, size = 0x4, offset = 0x4, fixed_abs, tag = 'smem constant byte address 0x4 - core index']
  #allocation1 [shape = 'u32[72,128]{1,0:T(1,128)}', space=vmem, size = 0x9000, scoped, tag = 'internal scratch']
  #allocation9 [shape = 's32[]', space=sflag, size = 0x4, offset = 0, fixed_abs, tag = 'sflag constant byte address 0x0 - dummy sync flag']
  %s0 = inlined_call_operand.hbm [shape: f32[2,3,16,128], index: 0, kind: input, shape index: {}]
  %s1 = inlined_call_operand.hbm [shape: f32[16,128], index: 1, kind: input, shape index: {}]
  %s2 = inlined_call_operand.hbm [shape: f32[16,128], index: 2, kind: input, shape index: {}]
  %s3 = inlined_call_operand.hbm [shape: bf16[3,32,384], index: 3, kind: output, shape index: {}]
  %s4 = sld [smem:[#allocation0]]
  $region57: #{tpu_custom_call.1} parent=0
    _
  %s6 = ssub.s32 1, %s4
  %s7 = scalar_select 0, %s6, %s4
  $region1: #{tpu_custom_call.1} parent=0
    #allocation2 [shape = 'u8[49152]{0}', space=vmem, size = 0xc000, scoped, tag = 'input window, operand 0']
    #allocation3 [shape = 's32[2]{0}', space=sflag, size = 0x8, scoped, tag = 'scoped memory for tpu_custom_call.1']
    #allocation4 [shape = 's32[2]{0}', space=sflag, size = 0x8, scoped, tag = 'scoped memory for tpu_custom_call.1']
    #allocation5 [shape = 'u8[8192]{0}', space=vmem, size = 0x2000, scoped, tag = 'input window, operand 1, single buffered']
    #allocation6 [shape = 's32[1]{0}', space=sflag, size = 0x4, scoped, tag = 'scoped memory for tpu_custom_call.1']
    #allocation7 [shape = 'u8[8192]{0}', space=vmem, size = 0x2000, scoped, tag = 'input window, operand 2, single buffered']
    #allocation8 [shape = 'u8[73728]{0}', space=vmem, size = 0x12000, scoped, tag = 'output window, operand 0']
    %8 = vsyncpa [#allocation3], 0
    %s9 = scalar_lea.sflag [#allocation3], 1
    %10 = vsyncpa %s9, 0
    %11 = vsyncpa [#allocation6], 0
    %12 = vsyncpa [#allocation4], 0
    %s13 = scalar_lea.sflag [#allocation4], 1
    %14 = vsyncpa %s13, 0
    loop: start=0, step=1, limit=4
    $region2: #{tpu_custom_call.1} parent=1 // loop_pre_header
      _
    $region3: #{tpu_custom_call.1} parent=1 // loop_header
      %s16 = sphi 0, %s20
      %p17 = scmp.ge.s32.totalorder %s16, 4
      %s23 = sphi 0, %s35
      %s24 = sphi 0, %s31
      %s25 = sphi 0, %s23
      %s26 = sphi 0, %s24
      %s27 = sphi 0, %s25
      %s28 = sphi 0, %s26
      %s40 = sphi 0, %s42
      %s43 = sphi 0, %s40
      %s44 = sphi 0, %s43
      %s60 = sphi 0, %s44
      %s66 = sphi 0, %s68
      %s69 = sphi 0, %s66
      %s70 = sphi 0, %s69
      %s86 = sphi 0, %s70
      %s92 = sphi 0, %s94
      %s95 = sphi 0, %s92
      %s96 = sphi 0, %s95
      %s112 = sphi 0, %s96
      %s120 = sphi 0, %s122
      %s123 = sphi 0, %s120
      %s124 = sphi 0, %s123
      %s140 = sphi 0, %s124
    $region4: #{tpu_custom_call.1} parent=1 // loop_header_branch
      %19 = sbr.rel (%p17) target = $region8
    $region5: #{tpu_custom_call.1} parent=1 // loop_body
      %s21 = ssub.s32 %s16, 1
      %s22 = ssub.s32 %s16, 2
      %s29 = sadd.s32 1, %s24
      %p30 = scmp.ge.s32.totalorder %s29, 1
      %s31 = scalar_select %p30, 0, %s29
      %s32 = sadd.s32 1, %s23
      %s33 = scalar_select %p30, %s32, %s23
      %p34 = scmp.ge.s32.totalorder %s33, 2
      %s35 = scalar_select %p34, 0, %s33
      %s36 = ssub.s32 %s23, %s35
      %s37 = ssub.s32 %s24, %s31
      %s38 = sor.u32 %s36, %s37
      %p39 = scmp.eq.s32.totalorder %s38, 0
      %s41 = sadd.s32 %s40, 1
      %s42 = scalar_select %p39, %s40, %s41
      %p45 = pneg %p39
      %p46 = scmp.eq.s32.totalorder %s16, 1
      %p47 = por %p45, %p46
      %p48 = scmp.ne.s32.totalorder %s40, %s43
      %p49 = scmp.eq.s32.totalorder %s16, 0
      %p50 = por %p48, %p49
      %p51 = scmp.ne.s32.totalorder %s40, %s43
      %p52 = scmp.eq.s32.totalorder %s21, 1
      %p53 = por %p51, %p52
      %p54 = scmp.ne.s32.totalorder %s43, %s44
      %p55 = scmp.eq.s32.totalorder %s21, 0
      %p56 = por %p54, %p55
      %p57 = scmp.ne.s32.totalorder %s43, %s44
      %p58 = scmp.eq.s32.totalorder %s22, 1
      %p59 = por %p57, %p58
      %p61 = scmp.ne.s32.totalorder %s44, %s60
      %p62 = scmp.eq.s32.totalorder %s22, 0
      %p63 = por %p61, %p62
      %s64 = ssub.s32 %s24, %s31
      %p65 = scmp.eq.s32.totalorder %s64, 0
      %s67 = sadd.s32 %s66, 1
      %s68 = scalar_select %p65, %s66, %s67
      %p71 = pneg %p65
      %p72 = scmp.eq.s32.totalorder %s16, 1
      %p73 = por %p71, %p72
      %p74 = scmp.ne.s32.totalorder %s66, %s69
      %p75 = scmp.eq.s32.totalorder %s16, 0
      %p76 = por %p74, %p75
      %p77 = scmp.ne.s32.totalorder %s66, %s69
      %p78 = scmp.eq.s32.totalorder %s21, 1
      %p79 = por %p77, %p78
      %p80 = scmp.ne.s32.totalorder %s69, %s70
      %p81 = scmp.eq.s32.totalorder %s21, 0
      %p82 = por %p80, %p81
      %p83 = scmp.ne.s32.totalorder %s69, %s70
      %p84 = scmp.eq.s32.totalorder %s22, 1
      %p85 = por %p83, %p84
      %p87 = scmp.ne.s32.totalorder %s70, %s86
      %p88 = scmp.eq.s32.totalorder %s22, 0
      %p89 = por %p87, %p88
      %s90 = ssub.s32 %s24, %s31
      %p91 = scmp.eq.s32.totalorder %s90, 0
      %s93 = sadd.s32 %s92, 1
      %s94 = scalar_select %p91, %s92, %s93
      %p97 = pneg %p91
      %p98 = scmp.eq.s32.totalorder %s16, 1
      %p99 = por %p97, %p98
      %p100 = scmp.ne.s32.totalorder %s92, %s95
      %p101 = scmp.eq.s32.totalorder %s16, 0
      %p102 = por %p100, %p101
      %p103 = scmp.ne.s32.totalorder %s92, %s95
      %p104 = scmp.eq.s32.totalorder %s21, 1
      %p105 = por %p103, %p104
      %p106 = scmp.ne.s32.totalorder %s95, %s96
      %p107 = scmp.eq.s32.totalorder %s21, 0
      %p108 = por %p106, %p107
      %p109 = scmp.ne.s32.totalorder %s95, %s96
      %p110 = scmp.eq.s32.totalorder %s22, 1
      %p111 = por %p109, %p110
      %p113 = scmp.ne.s32.totalorder %s96, %s112
      %p114 = scmp.eq.s32.totalorder %s22, 0
      %p115 = por %p113, %p114
      %s116 = sadd.s32 %s23, %s24
      %s117 = sadd.s32 %s35, %s31
      %s118 = ssub.s32 %s116, %s117
      %p119 = scmp.eq.s32.totalorder %s118, 0
      %s121 = sadd.s32 %s120, 1
      %s122 = scalar_select %p119, %s120, %s121
      %p125 = pneg %p119
      %p126 = scmp.eq.s32.totalorder %s16, 1
      %p127 = por %p125, %p126
      %p128 = scmp.ne.s32.totalorder %s120, %s123
      %p129 = scmp.eq.s32.totalorder %s16, 0
      %p130 = por %p128, %p129
      %p131 = scmp.ne.s32.totalorder %s120, %s123
      %p132 = scmp.eq.s32.totalorder %s21, 1
      %p133 = por %p131, %p132
      %p134 = scmp.ne.s32.totalorder %s123, %s124
      %p135 = scmp.eq.s32.totalorder %s21, 0
      %p136 = por %p134, %p135
      %p137 = scmp.ne.s32.totalorder %s123, %s124
      %p138 = scmp.eq.s32.totalorder %s22, 1
      %p139 = por %p137, %p138
      %p141 = scmp.ne.s32.totalorder %s124, %s140
      %p142 = scmp.eq.s32.totalorder %s22, 0
      %p143 = por %p141, %p142
      %p144 = scmp.le.s32.totalorder 1, %s16
      %p145 = scmp.lt.s32.totalorder %s16, 3
      %p146 = pnand %p144, %p145
      %p147 = pneg %p146
      // Predicated region
      $region9: #{tpu_custom_call.1} parent=5 // pred_check
        _
      $region10: #{tpu_custom_call.1} parent=5 // pred_check_branch
        %149 = sbr.rel (%p146) target = $region12
      $region11: #{tpu_custom_call.1} parent=5 // pred_region
        %s150 = ssub.s32 %s16, 1
        // Predicated region
        $region13: #{tpu_custom_call.1} parent=11 // pred_check
          %p151 = pneg %p82
        $region14: #{tpu_custom_call.1} parent=11 // pred_check_branch
          %153 = sbr.rel (%p151) target = $region16
        $region15: #{tpu_custom_call.1} parent=11 // pred_region
          %s154 = smul.u32 2, %s26
          %156 = vsyncadd [#allocation6], 0
          %s157 = smul.addr %s154, 8
          %s158 = scalar_lea.hbm %s1, %s157
          %s159 = sshll.u32 %s158, 4
          %s160 = int_to_ptr.hbm [resolvable:$true] %s159
          %s161 = sshll.u32 [#allocation5], 4
          %s162 = int_to_ptr.vmem [resolvable:$true] %s161
          %167 = dma.hbm_to_vmem [thread:$0]  %s160, 256, %s162, [#allocation6], 128, 128, 8
        $region16: #{tpu_custom_call.1} parent=11 // pred_fallthru
          _
        // Predicated region
        $region17: #{tpu_custom_call.1} parent=11 // pred_check
          %p168 = pneg %p108
        $region18: #{tpu_custom_call.1} parent=11 // pred_check_branch
          %170 = sbr.rel (%p168) target = $region20
        $region19: #{tpu_custom_call.1} parent=11 // pred_region
          %s171 = smul.u32 2, %s26
          %173 = vsyncadd [#allocation6], 0
          %s174 = smul.addr %s171, 8
          %s175 = scalar_lea.hbm %s2, %s174
          %s176 = sshll.u32 %s175, 4
          %s177 = int_to_ptr.hbm [resolvable:$true] %s176
          %s178 = sshll.u32 [#allocation7], 4
          %s179 = int_to_ptr.vmem [resolvable:$true] %s178
          %184 = dma.hbm_to_vmem [thread:$0]  %s177, 256, %s179, [#allocation6], 128, 128, 8
        $region20: #{tpu_custom_call.1} parent=11 // pred_fallthru
          _
      $region12: #{tpu_custom_call.1} parent=5 // pred_fallthru
        _
      %p185 = scmp.lt.s32.totalorder %s16, 2
      // Predicated region
      $region21: #{tpu_custom_call.1} parent=5 // pred_check
        %p186 = pneg %p185
      $region22: #{tpu_custom_call.1} parent=5 // pred_check_branch
        %188 = sbr.rel (%p186) target = $region24
      $region23: #{tpu_custom_call.1} parent=5 // pred_region
        // Predicated region
        $region25: #{tpu_custom_call.1} parent=23 // pred_check
          %p189 = pneg %p50
        $region26: #{tpu_custom_call.1} parent=23 // pred_check_branch
          %191 = sbr.rel (%p189) target = $region28
        $region27: #{tpu_custom_call.1} parent=23 // pred_region
          %s192 = sand.u32 %s40, 1
          %s193 = scalar_lea.sflag [#allocation3], %s192
          %s194 = sand.u32 %s40, 1
          %s195 = smul.addr %s194, 48
          %s196 = scalar_lea.vmem [#allocation2], %s195
          %s197 = smul.u32 2, %s24
          %199 = vsyncadd %s193, 0
          %s200 = smul.addr %s23, 6
          %s201 = sadd.s32 %s197, %s200
          %s202 = smul.addr %s201, 8
          %s203 = scalar_lea.hbm %s0, %s202
          %s204 = sshll.u32 %s203, 4
          %s205 = int_to_ptr.hbm [resolvable:$true] %s204
          %s206 = sshll.u32 %s196, 4
          %s207 = int_to_ptr.vmem [resolvable:$true] %s206
          %212 = dma.hbm_to_vmem [thread:$0]  %s205, 768, %s207, %s193, 128, 128, 8
        $region28: #{tpu_custom_call.1} parent=23 // pred_fallthru
          _
      $region24: #{tpu_custom_call.1} parent=5 // pred_fallthru
        _
      %p213 = scmp.le.s32.totalorder 1, %s16
      %p214 = scmp.lt.s32.totalorder %s16, 3
      %p215 = pnand %p213, %p214
      %p216 = pneg %p215
      // Predicated region
      $region29: #{tpu_custom_call.1} parent=5 // pred_check
        _
      $region30: #{tpu_custom_call.1} parent=5 // pred_check_branch
        %218 = sbr.rel (%p215) target = $region32
      $region31: #{tpu_custom_call.1} parent=5 // pred_region
        %s219 = ssub.s32 %s16, 1
        %s220 = sand.u32 %s43, 1
        %s221 = scalar_lea.sflag [#allocation3], %s220
        %s222 = sand.u32 %s43, 1
        %s223 = smul.addr %s222, 48
        %s224 = scalar_lea.vmem [#allocation2], %s223
        // Predicated region
        $region33: #{tpu_custom_call.1} parent=31 // pred_check
          %p225 = pneg %p56
        $region34: #{tpu_custom_call.1} parent=31 // pred_check_branch
          %227 = sbr.rel (%p225) target = $region36
        $region35: #{tpu_custom_call.1} parent=31 // pred_region
          %229 = dma.done %s221, 768
        $region36: #{tpu_custom_call.1} parent=31 // pred_fallthru
          _
        // Predicated region
        $region37: #{tpu_custom_call.1} parent=31 // pred_check
          %p230 = pneg %p82
        $region38: #{tpu_custom_call.1} parent=31 // pred_check_branch
          %232 = sbr.rel (%p230) target = $region40
        $region39: #{tpu_custom_call.1} parent=31 // pred_region
          %234 = dma.done [#allocation6], 256
        $region40: #{tpu_custom_call.1} parent=31 // pred_fallthru
          _
        // Predicated region
        $region41: #{tpu_custom_call.1} parent=31 // pred_check
          %p235 = pneg %p108
        $region42: #{tpu_custom_call.1} parent=31 // pred_check_branch
          %237 = sbr.rel (%p235) target = $region44
        $region43: #{tpu_custom_call.1} parent=31 // pred_region
          %239 = dma.done [#allocation6], 256
        $region44: #{tpu_custom_call.1} parent=31 // pred_fallthru
          _
        %s240 = sand.u32 %s43, 1
        %s241 = scalar_lea.sflag [#allocation3], %s240
        %s242 = sand.u32 %s43, 1
        %s243 = smul.addr %s242, 48
        %s244 = scalar_lea.vmem [#allocation2], %s243
        %p245 = pneg %p56
        %p246 = pneg %p53
        %p247 = pneg %p82
        %p248 = pneg %p79
        %p249 = pneg %p108
        %p250 = pneg %p105
        %p251 = pneg %p136
        %p252 = pneg %p133
        %s253 = sand.u32 %s123, 1
        %s254 = scalar_lea.sflag [#allocation4], %s253
        %s255 = sand.u32 %s123, 1
        %s256 = smul.addr %s255, 72
        %s257 = scalar_lea.vmem [#allocation8], %s256
        %s258 = smul.u32 2, %s26
        %s259 = smul.u32 2, %s26
        %s260 = smul.u32 2, %s26
        %s261 = sadd.s32 %s25, %s26
        %s262 = smul.u32 2, %s261
        %v263 = vld [vmem:[%s224] sm:$0xff]
        %v264 = vld [vmem:[%s224 + $0x8] sm:$0xff]
        %v265 = vld [vmem:[%s224 + $0x10] sm:$0xff]
        %v266 = vld [vmem:[%s224 + $0x18] sm:$0xff]
        %v267 = vld [vmem:[%s224 + $0x20] sm:$0xff]
        %v268 = vld [vmem:[%s224 + $0x28] sm:$0xff]
        %v269 = vpack.c.bf16 %v263, %v263
        %v270 = vpack.c.bf16 %v264, %v264
        %v271 = vpack.c.bf16 %v265, %v265
        %v272 = vpack.c.bf16 %v266, %v266
        %v273 = vpack.c.bf16 %v267, %v267
        %v274 = vpack.c.bf16 %v268, %v268
        %275 = vst [vmem:[%s257] sm:$0xf] %v269
        %276 = vst [vmem:[%s257 + $0xc] sm:$0xf] %v270
        %277 = vst [vmem:[%s257 + $0x18] sm:$0xf] %v271
        %278 = vst [vmem:[%s257 + $0x24] sm:$0xf] %v272
        %279 = vst [vmem:[%s257 + $0x30] sm:$0xf] %v273
        %280 = vst [vmem:[%s257 + $0x3c] sm:$0xf] %v274
        %v281 = vld [vmem:[#allocation5] sm:$0xff]
        %v282 = vld [vmem:[#allocation5 + $0x8] sm:$0xff]
        %v283 = vpack.c.bf16 %v281, %v281
        %v284 = vpack.c.bf16 %v282, %v282
        %v285 = vld [vmem:[#allocation7] sm:$0xff]
        %v286 = vld [vmem:[#allocation7 + $0x8] sm:$0xff]
        %v287 = vpack.c.bf16 %v285, %v285
        %v288 = vpack.c.bf16 %v286, %v286
        %289 = vst [vmem:[%s257 + $0x4] sm:$0xf] %v283
        %290 = vst [vmem:[%s257 + $0x10] sm:$0xf] %v284
        %291 = vst [vmem:[%s257 + $0x1c] sm:$0xf] %v283
        %292 = vst [vmem:[%s257 + $0x28] sm:$0xf] %v284
        %293 = vst [vmem:[%s257 + $0x34] sm:$0xf] %v283
        %294 = vst [vmem:[%s257 + $0x40] sm:$0xf] %v284
        %295 = vst [vmem:[%s257 + $0x8] sm:$0xf] %v287
        %296 = vst [vmem:[%s257 + $0x14] sm:$0xf] %v288
        %297 = vst [vmem:[%s257 + $0x20] sm:$0xf] %v287
        %298 = vst [vmem:[%s257 + $0x2c] sm:$0xf] %v288
        %299 = vst [vmem:[%s257 + $0x38] sm:$0xf] %v287
        %300 = vst [vmem:[%s257 + $0x44] sm:$0xf] %v288
        %s301 = sand.u32 %s123, 1
        %s302 = scalar_lea.sflag [#allocation4], %s301
        %s303 = sand.u32 %s123, 1
        %s304 = smul.addr %s303, 72
        %s305 = scalar_lea.vmem [#allocation8], %s304
        // Predicated region
        $region45: #{tpu_custom_call.1} parent=31 // pred_check
          %p306 = pneg %p133
        $region46: #{tpu_custom_call.1} parent=31 // pred_check_branch
          %308 = sbr.rel (%p306) target = $region48
        $region47: #{tpu_custom_call.1} parent=31 // pred_region
          #allocation10 [shape = 'u32[6]{0}', space=smem, size = 0x18, scoped, tag = 'DMA stride descriptor']
          %s309 = sadd.s32 %s25, %s26
          %s310 = smul.u32 2, %s309
          %312 = vsyncadd %s302, 0
          %s313 = smul.addr %s310, 3
          %s314 = smul.addr %s313, 4
          %s315 = scalar_lea.hbm %s3, %s314
          %s317 = sshll.u32 1, 14
          %s318 = sxor.u32 4294967295, %s317
          %s321 = sshll.u32 7, 18
          %s322 = sxor.u32 4294967295, %s321
          %s323 = sand.u32 0, %s322
          %s325 = sor.u32 %s323, 0
          %s326 = sshll.u32 %s305, 4
          %s327 = int_to_ptr.vmem [resolvable:$true] %s326
          %s328 = sshll.u32 %s315, 4
          %s329 = int_to_ptr.hbm [resolvable:$true] %s328
          %335 = sst [smem:[#allocation10]] 384
          %s336 = scalar_lea.smem [#allocation10], 1
          %337 = sst [smem:[%s336]] 768
          %s338 = scalar_lea.smem [#allocation10], 2
          %339 = sst [smem:[%s338]] 2
          %s340 = scalar_lea.smem [#allocation10], 3
          %341 = sst [smem:[%s340]] 192
          %s342 = scalar_lea.smem [#allocation10], 4
          %343 = sst [smem:[%s342]] 192
          %s344 = scalar_lea.smem [#allocation10], 5
          %345 = sst [smem:[%s344]] 12
          %347 = dma.general %s327, 1152, %s329, %s302, [#allocation9], [#allocation10], %s325, 0
        $region48: #{tpu_custom_call.1} parent=31 // pred_fallthru
          _
      $region32: #{tpu_custom_call.1} parent=5 // pred_fallthru
        _
      %p348 = scmp.le.s32.totalorder 2, %s16
      // Predicated region
      $region49: #{tpu_custom_call.1} parent=5 // pred_check
        %p349 = pneg %p348
      $region50: #{tpu_custom_call.1} parent=5 // pred_check_branch
        %351 = sbr.rel (%p349) target = $region52
      $region51: #{tpu_custom_call.1} parent=5 // pred_region
        %s352 = ssub.s32 %s16, 2
        // Predicated region
        $region53: #{tpu_custom_call.1} parent=51 // pred_check
          %p353 = pneg %p139
        $region54: #{tpu_custom_call.1} parent=51 // pred_check_branch
          %355 = sbr.rel (%p353) target = $region56
        $region55: #{tpu_custom_call.1} parent=51 // pred_region
          %s356 = sand.u32 %s124, 1
          %s357 = scalar_lea.sflag [#allocation4], %s356
          %s358 = sand.u32 %s124, 1
          %s359 = smul.addr %s358, 72
          %s360 = scalar_lea.vmem [#allocation8], %s359
          %362 = dma.done %s357, 1152
        $region56: #{tpu_custom_call.1} parent=51 // pred_fallthru
          _
      $region52: #{tpu_custom_call.1} parent=5 // pred_fallthru
        _
    $region6: #{tpu_custom_call.1} parent=1 // loop_footer
      %s20 = sadd.s32 1, %s16
    $region7: #{tpu_custom_call.1} parent=1 // loop_footer_branch
      %15 = sbr.rel target = $region3
    $region8: #{tpu_custom_call.1} parent=1 // loop_exit
      _
    %363 = vsyncpa [#allocation3], 1
    %s364 = scalar_lea.sflag [#allocation3], 1
    %365 = vsyncpa %s364, 1
    %366 = vsyncpa [#allocation6], 1
    %367 = vsyncpa [#allocation4], 1
    %s368 = scalar_lea.sflag [#allocation4], 1
    %369 = vsyncpa %s368, 1

</llo_original>
